<compile_context>
chip_gen: v7x
topology: tpu7x:2x2x1
jax: 0.10.0
libtpu: 0.0.40
codegen_flags: <defaults>
</compile_context>

<pallas_src>
import math
import numpy as np
import jax
import jax.numpy as jnp
from jax.experimental import pallas as pl
from jax.experimental.pallas import tpu as pltpu


# ----------------------------------------------------------------------------
# Weight init: replicate the module's weight_init (scipy.ndimage.gaussian_filter
# on a KxK delta).  That filter is two sequential 1-D reflect-boundary passes, so
# on a centered delta the result is exactly outer(a, a); we only need `a`.
# ----------------------------------------------------------------------------
def _gaussian_blur_taps(radius):
    K = 2 * radius + 1
    sigma = 0.3 * (radius - 1) + 0.8
    lw = int(4.0 * sigma + 0.5)                      # scipy truncate=4.0
    xg = np.arange(-lw, lw + 1, dtype=np.float64)
    k1d = np.exp(-0.5 * (xg / sigma) ** 2)
    k1d /= k1d.sum()
    delta = np.zeros(K, dtype=np.float64)
    delta[radius] = 1.0
    dp = np.pad(delta, lw, mode="symmetric")         # scipy 'reflect' == numpy 'symmetric'
    a = np.array([np.dot(dp[i:i + 2 * lw + 1], k1d) for i in range(K)])
    return a


def _banded_matrix(taps, W):
    """B (W, W) f32 such that (row-vector x) @ B == 1-D conv of x with taps, zero padded."""
    K = taps.shape[0]
    r = (K - 1) // 2
    B = np.zeros((W, W), dtype=np.float64)
    for j in range(W):
        for d in range(-r, r + 1):
            l = j + d
            if 0 <= l < W:
                B[l, j] = taps[d + r]
    return B.astype(np.float32)


# ----------------------------------------------------------------------------
# Pallas kernel: blur on a block of `pb` packed groups, each group = g planes
# laid side-by-side along the lane axis (last dim Wl = g * W, multiple of 128).
# ----------------------------------------------------------------------------
def _make_blur_kernel(pb, H, Wl, radius, taps):
    K = 2 * radius + 1
    taps_f = [float(t) for t in taps]
    Hpad = ((H + 7) // 8) * 8

    def kernel(x_ref, b_ref, o_ref):
        # x_ref : (pb, H, Wl)   packed input planes (VMEM)
        # b_ref : (Wl, Wl)      block-diagonal banded horizontal-pass matrix (VMEM)
        # o_ref : (pb, H, Wl)   packed output planes (VMEM)
        x = x_ref[...].astype(jnp.float32)

        # Vertical 1-D pass: sublane rolls (XLU) + boundary masks (VPU). Zero padding
        # in H is realized by masking the wrapped rows.
        acc = taps_f[radius] * x
        if K > 1:
            row = jax.lax.broadcasted_iota(jnp.int32, (pb, H, Wl), 1)
            for k in range(K):
                d = k - radius
                if d == 0:
                    continue
                shifted = pltpu.roll(x, shift=(-d) % H, axis=1)
                valid = jnp.logical_and(row + d >= 0, row + d < H)
                acc = acc + taps_f[k] * jnp.where(valid, shifted, 0.0)

        # Horizontal 1-D pass: one block-diagonal banded matmul on the MXU.  The band
        # encodes zero padding and keeps packed planes from mixing.  Pad H to a
        # sublane-tile multiple so the (pb, Hpad) -> (pb*Hpad) collapse is a free
        # relayout and a single matmul is issued (no per-plane Python loop).
        if Hpad != H:
            acc = jnp.concatenate(
                [acc, jnp.zeros((pb, Hpad - H, Wl), jnp.float32)], axis=1)
        out2d = jnp.dot(acc.reshape(pb * Hpad, Wl), b_ref[...],
                        preferred_element_type=jnp.float32)
        out3 = out2d.reshape(pb, Hpad, Wl)
        if Hpad != H:
            out3 = out3[:, :H, :]
        o_ref[...] = out3.astype(o_ref.dtype)

    return kernel


def _vmem_limit_bytes():
    cap = 64 * 1024 * 1024
    try:
        info = pltpu.get_tpu_info()
        c = getattr(info, "vmem_capacity_bytes", None)
        if c:
            cap = int(c)
    except Exception:
        pass
    # <= ~48 MiB on 64 MiB (v7x) parts, ~96 MiB on 128 MiB (v5e/v6e) parts.
    return max(32 * 1024 * 1024, min(3 * cap // 4, 96 * 1024 * 1024))


def gaussian_blur_pallas(x, radius):
    """x: (N, 3, H, W) float32. Returns (N, 3, H, W), same as the PyTorch module."""
    N, C, H, W = x.shape
    assert C == 3, "GaussianBlur expects 3 input channels"
    NP = N * C

    taps = _gaussian_blur_taps(radius)

    # Pack g planes along lanes so the last dim is a multiple of 128 (lane-dense).
    g = 128 // math.gcd(W, 128)
    Wl = g * W
    band = jnp.asarray(np.kron(np.eye(g, dtype=np.float32), _banded_matrix(taps, W)))
    band_bytes = int(band.size) * 4

    NP_pad = ((NP + g - 1) // g) * g
    G = NP_pad // g

    x3 = x.reshape(NP, H, W)
    if NP_pad != NP:
        x3 = jnp.pad(x3, ((0, NP_pad - NP), (0, 0), (0, 0)))
    xp = x3.reshape(G, g, H, W).transpose(0, 2, 1, 3).reshape(G, H, Wl)

    # Block sizing from a VMEM budget: in/out blocks are double-buffered, the band
    # costs 2 buffers, plus headroom for in-kernel f32 temporaries.
    vmem_limit = _vmem_limit_bytes()
    group_bytes = 4 * H * Wl
    per_group_live = 8 * group_bytes                 # 2x in + 2x out + ~4 temporaries
    budget = vmem_limit - 2 * band_bytes - (2 << 20)
    pb = max(1, min(G, budget // per_group_live))
    if G >= 2:
        # Keep >=2 grid steps: pipeline overlap everywhere, megacore sharding on v7x.
        pb = min(pb, (G + 1) // 2)
    pb = int(pb)
    n_steps = (G + pb - 1) // pb                     # ragged last block is fine

    kernel = _make_blur_kernel(pb, H, Wl, radius, taps)

    outp = pl.pallas_call(
        kernel,
        out_shape=jax.ShapeDtypeStruct((G, H, Wl), x.dtype),
        grid_spec=pltpu.PrefetchScalarGridSpec(
            num_scalar_prefetch=0,
            grid=(n_steps,),
            in_specs=[
                pl.BlockSpec((pb, H, Wl), lambda i: (i, 0, 0)),
                pl.BlockSpec((Wl, Wl), lambda i: (0, 0)),
            ],
            out_specs=pl.BlockSpec((pb, H, Wl), lambda i: (i, 0, 0)),
        ),
        compiler_params=pltpu.CompilerParams(
            dimension_semantics=("parallel",),
            vmem_limit_bytes=int(vmem_limit),
        ),
    )(xp, band)

    out3 = outp.reshape(G, H, g, W).transpose(0, 2, 1, 3).reshape(NP_pad, H, W)
    return out3[:NP].reshape(N, C, H, W)


# ----------------------------------------------------------------------------
# Reference (plain JAX) depthwise conv with the module's 2-D weight.
# ----------------------------------------------------------------------------
def gaussian_blur_ref(x, radius):
    C = x.shape[1]
    taps = _gaussian_blur_taps(radius)
    w2d = np.outer(taps, taps).astype(np.float32)          # the module's Conv2d weight
    w = jnp.asarray(np.broadcast_to(w2d, (C, 1) + w2d.shape).copy())
    return jax.lax.conv_general_dilated(
        x, w,
        window_strides=(1, 1),
        padding=[(radius, radius), (radius, radius)],
        dimension_numbers=("NCHW", "OIHW", "NCHW"),
        feature_group_count=C,
    )


if __name__ == "__main__":
    radius = 2                     # kernel_size = 5, sigma = 0.3*(2-1)+0.8 = 1.1
    N, C, H, W = 2, 3, 16, 16

    key = jax.random.PRNGKey(0)
    x = jax.random.normal(key, (N, C, H, W), dtype=jnp.float32)

    y = jax.block_until_ready(gaussian_blur_pallas(x, radius))
    y_ref = jax.block_until_ready(gaussian_blur_ref(x, radius))

    assert y.shape == (N, C, H, W)
    assert jnp.allclose(y, y_ref, atol=1e-5, rtol=1e-5), "mismatch vs reference conv"
    print("KERNEL_OK")
</pallas_src>

<mosaic_0001>
module attributes {stable_mosaic.version = 11 : i64} {
  func.func @kernel(%arg0: i32, %arg1: memref<1x16x128xf32, #tpu.memory_space<vmem>>, %arg2: memref<128x128xf32, #tpu.memory_space<vmem>>, %arg3: memref<1x16x128xf32, #tpu.memory_space<vmem>>) attributes {dimension_semantics = [#tpu.dimension_semantics<parallel>], iteration_bounds = array<i64: 1>, scalar_prefetch = 0 : i64, scratch_operands = 0 : i64, tpu.core_type = #tpu.core_type<tc>, window_params = [{transform_indices = @transform_0, window_bounds = array<i64: 1, 16, 128>}, {pipeline_mode = #tpu.pipeline_mode<synchronous>, transform_indices = @transform_1, window_bounds = array<i64: 128, 128>}, {transform_indices = @transform_2, window_bounds = array<i64: 1, 16, 128>}]} {
    %c0 = arith.constant 0 : index
    %c0_0 = arith.constant 0 : index
    %c0_1 = arith.constant 0 : index
    %0 = vector.load %arg1[%c0, %c0_0, %c0_1] : memref<1x16x128xf32, #tpu.memory_space<vmem>>, vector<1x16x128xf32>
    %cst = arith.constant 0.362683475 : f32
    %1 = vector.broadcast %cst : f32 to vector<1x16x128xf32>
    %2 = arith.mulf %1, %0 : vector<1x16x128xf32>
    %3 = tpu.iota {dimensions = array<i32: 1>} : vector<1x16x128xi32>
    %c2_i32 = arith.constant 2 : i32
    %4 = tpu.dynamic_rotate %0 by %c2_i32 dim 1 : vector<1x16x128xf32>, i32 -> vector<1x16x128xf32>
    %c-2_i32 = arith.constant -2 : i32
    %5 = vector.broadcast %c-2_i32 : i32 to vector<1x16x128xi32>
    %6 = arith.addi %3, %5 : vector<1x16x128xi32>
    %c0_i32 = arith.constant 0 : i32
    %7 = vector.broadcast %c0_i32 : i32 to vector<1x16x128xi32>
    %8 = arith.cmpi sge, %6, %7 : vector<1x16x128xi32>
    %c-2_i32_2 = arith.constant -2 : i32
    %9 = vector.broadcast %c-2_i32_2 : i32 to vector<1x16x128xi32>
    %10 = arith.addi %3, %9 : vector<1x16x128xi32>
    %c16_i32 = arith.constant 16 : i32
    %11 = vector.broadcast %c16_i32 : i32 to vector<1x16x128xi32>
    %12 = arith.cmpi slt, %10, %11 : vector<1x16x128xi32>
    %13 = arith.andi %8, %12 : vector<1x16x128xi1>
    %cst_3 = arith.constant 0.000000e+00 : f32
    %14 = vector.broadcast %cst_3 : f32 to vector<1x16x128xf32>
    %15 = arith.select %13, %4, %14 : vector<1x16x128xi1>, vector<1x16x128xf32>
    %cst_4 = arith.constant 0.0782501251 : f32
    %16 = vector.broadcast %cst_4 : f32 to vector<1x16x128xf32>
    %17 = arith.mulf %16, %15 : vector<1x16x128xf32>
    %18 = arith.addf %2, %17 : vector<1x16x128xf32>
    %c1_i32 = arith.constant 1 : i32
    %19 = tpu.dynamic_rotate %0 by %c1_i32 dim 1 : vector<1x16x128xf32>, i32 -> vector<1x16x128xf32>
    %c-1_i32 = arith.constant -1 : i32
    %20 = vector.broadcast %c-1_i32 : i32 to vector<1x16x128xi32>
    %21 = arith.addi %3, %20 : vector<1x16x128xi32>
    %c0_i32_5 = arith.constant 0 : i32
    %22 = vector.broadcast %c0_i32_5 : i32 to vector<1x16x128xi32>
    %23 = arith.cmpi sge, %21, %22 : vector<1x16x128xi32>
    %c-1_i32_6 = arith.constant -1 : i32
    %24 = vector.broadcast %c-1_i32_6 : i32 to vector<1x16x128xi32>
    %25 = arith.addi %3, %24 : vector<1x16x128xi32>
    %c16_i32_7 = arith.constant 16 : i32
    %26 = vector.broadcast %c16_i32_7 : i32 to vector<1x16x128xi32>
    %27 = arith.cmpi slt, %25, %26 : vector<1x16x128xi32>
    %28 = arith.andi %23, %27 : vector<1x16x128xi1>
    %cst_8 = arith.constant 0.000000e+00 : f32
    %29 = vector.broadcast %cst_8 : f32 to vector<1x16x128xf32>
    %30 = arith.select %28, %19, %29 : vector<1x16x128xi1>, vector<1x16x128xf32>
    %cst_9 = arith.constant 0.240408137 : f32
    %31 = vector.broadcast %cst_9 : f32 to vector<1x16x128xf32>
    %32 = arith.mulf %31, %30 : vector<1x16x128xf32>
    %33 = arith.addf %18, %32 : vector<1x16x128xf32>
    %c15_i32 = arith.constant 15 : i32
    %34 = tpu.dynamic_rotate %0 by %c15_i32 dim 1 : vector<1x16x128xf32>, i32 -> vector<1x16x128xf32>
    %c1_i32_10 = arith.constant 1 : i32
    %35 = vector.broadcast %c1_i32_10 : i32 to vector<1x16x128xi32>
    %36 = arith.addi %3, %35 : vector<1x16x128xi32>
    %c0_i32_11 = arith.constant 0 : i32
    %37 = vector.broadcast %c0_i32_11 : i32 to vector<1x16x128xi32>
    %38 = arith.cmpi sge, %36, %37 : vector<1x16x128xi32>
    %c1_i32_12 = arith.constant 1 : i32
    %39 = vector.broadcast %c1_i32_12 : i32 to vector<1x16x128xi32>
    %40 = arith.addi %3, %39 : vector<1x16x128xi32>
    %c16_i32_13 = arith.constant 16 : i32
    %41 = vector.broadcast %c16_i32_13 : i32 to vector<1x16x128xi32>
    %42 = arith.cmpi slt, %40, %41 : vector<1x16x128xi32>
    %43 = arith.andi %38, %42 : vector<1x16x128xi1>
    %cst_14 = arith.constant 0.000000e+00 : f32
    %44 = vector.broadcast %cst_14 : f32 to vector<1x16x128xf32>
    %45 = arith.select %43, %34, %44 : vector<1x16x128xi1>, vector<1x16x128xf32>
    %cst_15 = arith.constant 0.240408137 : f32
    %46 = vector.broadcast %cst_15 : f32 to vector<1x16x128xf32>
    %47 = arith.mulf %46, %45 : vector<1x16x128xf32>
    %48 = arith.addf %33, %47 : vector<1x16x128xf32>
    %c14_i32 = arith.constant 14 : i32
    %49 = tpu.dynamic_rotate %0 by %c14_i32 dim 1 : vector<1x16x128xf32>, i32 -> vector<1x16x128xf32>
    %c2_i32_16 = arith.constant 2 : i32
    %50 = vector.broadcast %c2_i32_16 : i32 to vector<1x16x128xi32>
    %51 = arith.addi %3, %50 : vector<1x16x128xi32>
    %c0_i32_17 = arith.constant 0 : i32
    %52 = vector.broadcast %c0_i32_17 : i32 to vector<1x16x128xi32>
    %53 = arith.cmpi sge, %51, %52 : vector<1x16x128xi32>
    %c2_i32_18 = arith.constant 2 : i32
    %54 = vector.broadcast %c2_i32_18 : i32 to vector<1x16x128xi32>
    %55 = arith.addi %3, %54 : vector<1x16x128xi32>
    %c16_i32_19 = arith.constant 16 : i32
    %56 = vector.broadcast %c16_i32_19 : i32 to vector<1x16x128xi32>
    %57 = arith.cmpi slt, %55, %56 : vector<1x16x128xi32>
    %58 = arith.andi %53, %57 : vector<1x16x128xi1>
    %cst_20 = arith.constant 0.000000e+00 : f32
    %59 = vector.broadcast %cst_20 : f32 to vector<1x16x128xf32>
    %60 = arith.select %58, %49, %59 : vector<1x16x128xi1>, vector<1x16x128xf32>
    %cst_21 = arith.constant 0.0782501251 : f32
    %61 = vector.broadcast %cst_21 : f32 to vector<1x16x128xf32>
    %62 = arith.mulf %61, %60 : vector<1x16x128xf32>
    %63 = arith.addf %48, %62 : vector<1x16x128xf32>
    %64 = vector.shape_cast %63 : vector<1x16x128xf32> to vector<16x128xf32>
    %c0_22 = arith.constant 0 : index
    %c0_23 = arith.constant 0 : index
    %65 = vector.load %arg2[%c0_22, %c0_23] : memref<128x128xf32, #tpu.memory_space<vmem>>, vector<128x128xf32>
    %cst_24 = arith.constant dense<0.000000e+00> : vector<16x128xf32>
    %66 = tpu.matmul %64, %65, %cst_24 {dimension_numbers = #tpu.dot_dimension_numbers<[1], [0], [0], [1], [0, 0, 1, 1], [], []>} : vector<16x128xf32>, vector<128x128xf32>, vector<16x128xf32> -> vector<16x128xf32>
    %67 = vector.shape_cast %66 : vector<16x128xf32> to vector<1x16x128xf32>
    %c0_25 = arith.constant 0 : index
    %c0_26 = arith.constant 0 : index
    %c0_27 = arith.constant 0 : index
    %68 = vector.load %arg3[%c0_25, %c0_26, %c0_27] : memref<1x16x128xf32, #tpu.memory_space<vmem>>, vector<1x16x128xf32>
    tpu.vector_store %arg3[%c0_25, %c0_26, %c0_27], %67 {strides = array<i32>} : memref<1x16x128xf32, #tpu.memory_space<vmem>>, vector<1x16x128xf32>,
    return
  }
  func.func @transform_0(%arg0: i32) -> (i32, i32, i32) {
    %c0_i32 = arith.constant 0 : i32
    %c0_i32_0 = arith.constant 0 : i32
    %c0_i32_1 = arith.constant 0 : i32
    return %arg0, %c0_i32, %c0_i32_0 : i32, i32, i32
  }
  func.func @transform_1(%arg0: i32) -> (i32, i32) {
    %c0_i32 = arith.constant 0 : i32
    %c0_i32_0 = arith.constant 0 : i32
    %c0_i32_1 = arith.constant 0 : i32
    return %c0_i32, %c0_i32_0 : i32, i32
  }
  func.func @transform_2(%arg0: i32) -> (i32, i32, i32) {
    %c0_i32 = arith.constant 0 : i32
    %c0_i32_0 = arith.constant 0 : i32
    %c0_i32_1 = arith.constant 0 : i32
    return %arg0, %c0_i32, %c0_i32_0 : i32, i32, i32
  }
}

</mosaic_0001>

<llo_original>
// kernel: tpu_custom_call.1
$region0: #{tpu_custom_call.1}
  #allocation0 [shape = 'u32[]', space=smem, size = 0x4, offset = 0x4, fixed_abs, tag = 'smem constant byte address 0x4 - core index']
  #allocation1 [shape = 'u32[144,128]{1,0:T(1,128)}', space=vmem, size = 0x12000, scoped, tag = 'internal scratch']
  %s0 = inlined_call_operand.hbm [shape: f32[1,16,128], index: 0, kind: input, shape index: {}]
  %s1 = inlined_call_operand.hbm [shape: f32[128,128], index: 1, kind: input, shape index: {}]
  %s2 = inlined_call_operand.hbm [shape: f32[1,16,128], index: 2, kind: output, shape index: {}]
  %s3 = sld [smem:[#allocation0]]
  $region26: #{tpu_custom_call.1} parent=0
    _
  %s5 = ssub.s32 1, %s3
  %s6 = scalar_select 0, %s5, %s3
  $region1: #{tpu_custom_call.1} parent=0
    #allocation2 [shape = 'u8[8192]{0}', space=vmem, size = 0x2000, scoped, tag = 'input window, operand 0, single buffered']
    #allocation3 [shape = 's32[1]{0}', space=sflag, size = 0x4, scoped, tag = 'scoped memory for tpu_custom_call.1']
    #allocation4 [shape = 's32[1]{0}', space=sflag, size = 0x4, scoped, tag = 'scoped memory for tpu_custom_call.1']
    #allocation5 [shape = 'u8[65536]{0}', space=vmem, size = 0x10000, scoped, tag = 'input window, operand 1, single buffered']
    #allocation6 [shape = 's32[1]{0}', space=sflag, size = 0x4, scoped, tag = 'scoped memory for tpu_custom_call.1']
    #allocation7 [shape = 'u8[8192]{0}', space=vmem, size = 0x2000, scoped, tag = 'output window, operand 0, single buffered']
    %7 = vsyncpa [#allocation3], 0
    %8 = vsyncpa [#allocation6], 0
    %9 = vsyncpa [#allocation4], 0
    // Predicated region
    $region2: #{tpu_custom_call.1} parent=1 // pred_check
      _
    $region3: #{tpu_custom_call.1} parent=1 // pred_check_branch
      %11 = sbr.rel (0) target = $region5
    $region4: #{tpu_custom_call.1} parent=1 // pred_region
      %s13 = ssub.s32 256, 256
      %14 = vsyncadd [#allocation3], %s13
      %s15 = sshll.u32 [#allocation2], 4
      %s16 = int_to_ptr.vmem [resolvable:$true] %s15
      %21 = dma.hbm_to_vmem [thread:$0]  %s0, 256, %s16, [#allocation3], 128, 128, 8
    $region5: #{tpu_custom_call.1} parent=1 // pred_fallthru
      _
    // Predicated region
    $region6: #{tpu_custom_call.1} parent=1 // pred_check
      _
    $region7: #{tpu_custom_call.1} parent=1 // pred_check_branch
      %23 = sbr.rel (0) target = $region9
    $region8: #{tpu_custom_call.1} parent=1 // pred_region
      %s25 = ssub.s32 2048, 2048
      %26 = vsyncadd [#allocation6], %s25
      %s27 = sshll.u32 [#allocation5], 4
      %s28 = int_to_ptr.vmem [resolvable:$true] %s27
      %33 = dma.hbm_to_vmem [thread:$0]  %s1, 2048, %s28, [#allocation6], 128, 128, 8
    $region9: #{tpu_custom_call.1} parent=1 // pred_fallthru
      _
    // Predicated region
    $region10: #{tpu_custom_call.1} parent=1 // pred_check
      _
    $region11: #{tpu_custom_call.1} parent=1 // pred_check_branch
      %35 = sbr.rel (0) target = $region13
    $region12: #{tpu_custom_call.1} parent=1 // pred_region
      %36 = dma.done [#allocation3], 256
    $region13: #{tpu_custom_call.1} parent=1 // pred_fallthru
      _
    // Predicated region
    $region14: #{tpu_custom_call.1} parent=1 // pred_check
      _
    $region15: #{tpu_custom_call.1} parent=1 // pred_check_branch
      %38 = sbr.rel (0) target = $region17
    $region16: #{tpu_custom_call.1} parent=1 // pred_region
      %39 = dma.done [#allocation6], 2048
    $region17: #{tpu_custom_call.1} parent=1 // pred_fallthru
      _
    %v40 = vld [vmem:[#allocation2] sm:$0xff]
    %v41 = vld [vmem:[#allocation2 + $0x8] sm:$0xff]
    %v42 = vmul.f32 %v40, 0.36268348
    %v43 = vmul.f32 %v41, 0.36268348
    %v44 = vlaneseq
    %v45 = vshrl.u32 %v44, 7
    %v46 = vadd.s32 %v45, 8
    %v47 = vrot.slane %v40, 6
    %v48 = vrot.slane %v41, 6
    %vm49 = vcmp.lt.s32.totalorder %v45, 2
    %v50 = vsel %vm49, %v47, %v48
    %v51 = vsel %vm49, %v48, %v47
    %v52 = vadd.s32 %v45, 4294967294
    %v53 = vadd.s32 %v46, 4294967294
    %vm54 = vcmp.ge.s32.totalorder %v52, 0
    %vm55 = vcmp.ge.s32.totalorder %v53, 0
    %vm56 = vcmp.lt.s32.totalorder %v52, 16
    %vm57 = vcmp.lt.s32.totalorder %v53, 16
    %vm58 = vmand %vm54, %vm56
    %vm59 = vmand %vm55, %vm57
    %v60 = vsel %vm58, %v51, 0.0
    %v61 = vsel %vm59, %v50, 0.0
    %v62 = vmul.f32 %v60, 0.078250125
    %v63 = vmul.f32 %v61, 0.078250125
    %v64 = vadd.f32 %v42, %v62
    %v65 = vadd.f32 %v43, %v63
    %v66 = vrot.slane %v40, 7
    %v67 = vrot.slane %v41, 7
    %vm68 = vcmp.lt.s32.totalorder %v45, 1
    %v69 = vsel %vm68, %v66, %v67
    %v70 = vsel %vm68, %v67, %v66
    %v71 = vadd.s32 %v45, 4294967295
    %v72 = vadd.s32 %v46, 4294967295
    %vm73 = vcmp.ge.s32.totalorder %v71, 0
    %vm74 = vcmp.ge.s32.totalorder %v72, 0
    %vm75 = vcmp.lt.s32.totalorder %v71, 16
    %vm76 = vcmp.lt.s32.totalorder %v72, 16
    %vm77 = vmand %vm73, %vm75
    %vm78 = vmand %vm74, %vm76
    %v79 = vsel %vm77, %v70, 0.0
    %v80 = vsel %vm78, %v69, 0.0
    %v81 = vmul.f32 %v79, 0.24040814
    %v82 = vmul.f32 %v80, 0.24040814
    %v83 = vadd.f32 %v64, %v81
    %v84 = vadd.f32 %v65, %v82
    %v85 = vrot.slane %v40, 1
    %v86 = vrot.slane %v41, 1
    %vm87 = vcmp.lt.s32.totalorder %v45, 7
    %v88 = vsel %vm87, %v85, %v86
    %v89 = vsel %vm87, %v86, %v85
    %v90 = vadd.s32 %v45, 1
    %v91 = vadd.s32 %v46, 1
    %vm92 = vcmp.ge.s32.totalorder %v90, 0
    %vm93 = vcmp.ge.s32.totalorder %v91, 0
    %vm94 = vcmp.lt.s32.totalorder %v90, 16
    %vm95 = vcmp.lt.s32.totalorder %v91, 16
    %vm96 = vmand %vm92, %vm94
    %vm97 = vmand %vm93, %vm95
    %v98 = vsel %vm96, %v88, 0.0
    %v99 = vsel %vm97, %v89, 0.0
    %v100 = vmul.f32 %v98, 0.24040814
    %v101 = vmul.f32 %v99, 0.24040814
    %v102 = vadd.f32 %v83, %v100
    %v103 = vadd.f32 %v84, %v101
    %v104 = vrot.slane %v40, 2
    %v105 = vrot.slane %v41, 2
    %vm106 = vcmp.lt.s32.totalorder %v45, 6
    %v107 = vsel %vm106, %v104, %v105
    %v108 = vsel %vm106, %v105, %v104
    %v109 = vadd.s32 %v45, 2
    %v110 = vadd.s32 %v46, 2
    %vm111 = vcmp.ge.s32.totalorder %v109, 0
    %vm112 = vcmp.ge.s32.totalorder %v110, 0
    %vm113 = vcmp.lt.s32.totalorder %v109, 16
    %vm114 = vcmp.lt.s32.totalorder %v110, 16
    %vm115 = vmand %vm111, %vm113
    %vm116 = vmand %vm112, %vm114
    %v117 = vsel %vm115, %v107, 0.0
    %v118 = vsel %vm116, %v108, 0.0
    %v119 = vmul.f32 %v117, 0.078250125
    %v120 = vmul.f32 %v118, 0.078250125
    %v121 = vadd.f32 %v102, %v119
    %v122 = vadd.f32 %v103, %v120
    %v123 = vld [vmem:[#allocation5] sm:$0xff]
    %v124 = vld [vmem:[#allocation5 + $0x8] sm:$0xff]
    %v125 = vld [vmem:[#allocation5 + $0x10] sm:$0xff]
    %v126 = vld [vmem:[#allocation5 + $0x18] sm:$0xff]
    %v127 = vld [vmem:[#allocation5 + $0x20] sm:$0xff]
    %v128 = vld [vmem:[#allocation5 + $0x28] sm:$0xff]
    %v129 = vld [vmem:[#allocation5 + $0x30] sm:$0xff]
    %v130 = vld [vmem:[#allocation5 + $0x38] sm:$0xff]
    %v131 = vld [vmem:[#allocation5 + $0x40] sm:$0xff]
    %v132 = vld [vmem:[#allocation5 + $0x48] sm:$0xff]
    %v133 = vld [vmem:[#allocation5 + $0x50] sm:$0xff]
    %v134 = vld [vmem:[#allocation5 + $0x58] sm:$0xff]
    %v135 = vld [vmem:[#allocation5 + $0x60] sm:$0xff]
    %v136 = vld [vmem:[#allocation5 + $0x68] sm:$0xff]
    %v137 = vld [vmem:[#allocation5 + $0x70] sm:$0xff]
    %v138 = vld [vmem:[#allocation5 + $0x78] sm:$0xff]
    %139 = vmatprep.subr.mxu0 0.0
    %140 = vmatpush1.msra.mxu0 %v123
    %141 = vmatprep.subr.mxu0 0.0
    %142 = vmatpush1.msra.mxu0 %v124
    %143 = vmatprep.subr.mxu0 0.0
    %144 = vmatpush1.msra.mxu0 %v125
    %145 = vmatprep.subr.mxu0 0.0
    %146 = vmatpush1.msra.mxu0 %v126
    %147 = vmatprep.subr.mxu0 0.0
    %148 = vmatpush1.msra.mxu0 %v127
    %149 = vmatprep.subr.mxu0 0.0
    %150 = vmatpush1.msra.mxu0 %v128
    %151 = vmatprep.subr.mxu0 0.0
    %152 = vmatpush1.msra.mxu0 %v129
    %153 = vmatprep.subr.mxu0 0.0
    %154 = vmatpush1.msra.mxu0 %v130
    %155 = vmatprep.subr.mxu0 0.0
    %156 = vmatpush1.msra.mxu0 %v131
    %157 = vmatprep.subr.mxu0 0.0
    %158 = vmatpush1.msra.mxu0 %v132
    %159 = vmatprep.subr.mxu0 0.0
    %160 = vmatpush1.msra.mxu0 %v133
    %161 = vmatprep.subr.mxu0 0.0
    %162 = vmatpush1.msra.mxu0 %v134
    %163 = vmatprep.subr.mxu0 0.0
    %164 = vmatpush1.msra.mxu0 %v135
    %165 = vmatprep.subr.mxu0 0.0
    %166 = vmatpush1.msra.mxu0 %v136
    %167 = vmatprep.subr.mxu0 0.0
    %168 = vmatpush1.msra.mxu0 %v137
    %169 = vmatprep.subr.mxu0 0.0
    %170 = vmatpush1.msra.mxu0 %v138
    %171 = vmatprep.subr.mxu0 0.0
    %172 = vmatpush1.msra.mxu0 0.0
    %173 = vmatprep.subr.mxu0 0.0
    %174 = vmatpush1.msra.mxu0 0.0
    %175 = vmatprep.subr.mxu0 0.0
    %176 = vmatpush1.msra.mxu0 0.0
    %177 = vmatprep.subr.mxu0 0.0
    %178 = vmatpush1.msra.mxu0 0.0
    %179 = vmatprep.subr.mxu0 0.0
    %180 = vmatpush1.msra.mxu0 0.0
    %181 = vmatprep.subr.mxu0 0.0
    %182 = vmatpush1.msra.mxu0 0.0
    %183 = vmatprep.subr.mxu0 0.0
    %184 = vmatpush1.msra.mxu0 0.0
    %185 = vmatprep.subr.mxu0 0.0
    %186 = vmatpush1.msra.mxu0 0.0
    %187 = vmatprep.subr.mxu0 0.0
    %188 = vmatpush1.msra.mxu0 0.0
    %189 = vmatprep.subr.mxu0 0.0
    %190 = vmatpush1.msra.mxu0 0.0
    %191 = vmatprep.subr.mxu0 0.0
    %192 = vmatpush1.msra.mxu0 0.0
    %193 = vmatprep.subr.mxu0 0.0
    %194 = vmatpush1.msra.mxu0 0.0
    %195 = vmatprep.subr.mxu0 0.0
    %196 = vmatpush1.msra.mxu0 0.0
    %197 = vmatprep.subr.mxu0 0.0
    %198 = vmatpush1.msra.mxu0 0.0
    %199 = vmatprep.subr.mxu0 0.0
    %200 = vmatpush1.msra.mxu0 0.0
    %201 = vmatprep.subr.mxu0 0.0
    %202 = vmatpush1.msra.mxu0 0.0
    %203 = vmatprep.mubr.f32.mxu0 0.0
    %204 = vmatmul.mubr.f32.gmra.mrb[0].mxu0 %v121
    %v205 = vpop.f32.mrb[0].mxu0
    %v206 = vadd.f32 0.0, %v205
    %v207 = vpop.f32.mrb[0].mxu0
    %208 = vmatprep.mubr.f32.mxu0 0.0
    %209 = vmatmul.mubr.f32.gmra.mrb[0].mxu0 %v122
    %v210 = vpop.f32.mrb[0].mxu0
    %v211 = vadd.f32 0.0, %v210
    %v212 = vpop.f32.mrb[0].mxu0
    %213 = vdwg.mxu0
    %214 = vst [vmem:[#allocation7] sm:$0xff] %v206
    %215 = vst [vmem:[#allocation7 + $0x8] sm:$0xff] %v211
    // Predicated region
    $region18: #{tpu_custom_call.1} parent=1 // pred_check
      _
    $region19: #{tpu_custom_call.1} parent=1 // pred_check_branch
      %217 = sbr.rel (0) target = $region21
    $region20: #{tpu_custom_call.1} parent=1 // pred_region
      %s219 = ssub.s32 256, 256
      %220 = vsyncadd [#allocation4], %s219
      %s221 = sshll.u32 [#allocation7], 4
      %s222 = int_to_ptr.vmem [resolvable:$true] %s221
      %227 = dma.vmem_to_hbm [thread:$0]  %s222, 256, %s2, [#allocation4], 128, 128, 8
    $region21: #{tpu_custom_call.1} parent=1 // pred_fallthru
      _
    // Predicated region
    $region22: #{tpu_custom_call.1} parent=1 // pred_check
      _
    $region23: #{tpu_custom_call.1} parent=1 // pred_check_branch
      %229 = sbr.rel (0) target = $region25
    $region24: #{tpu_custom_call.1} parent=1 // pred_region
      %230 = dma.done [#allocation4], 256
    $region25: #{tpu_custom_call.1} parent=1 // pred_fallthru
      _
    %231 = vsyncpa [#allocation3], 1
    %232 = vsyncpa [#allocation6], 1
    %233 = vsyncpa [#allocation4], 1

</llo_original>
